<compile_context>
chip_gen: v7x
topology: tpu7x:2x2x1
jax: 0.10.0
libtpu: 0.0.40
codegen_flags: <defaults>
</compile_context>

<pallas_src>
import jax
import jax.numpy as jnp
from jax import lax
from jax.experimental import pallas as pl
from jax.experimental.pallas import tpu as pltpu


def _linear_t_kernel(x_ref, w_ref, b_ref, o_ref):
    """One (batch b, L-tile) grid step.

    x_ref: (tl, C_in)    rows of the flattened (B*L, C) input view
    w_ref: (C_out, C_in) full weight, resident across the grid
    b_ref: (C_out, 1)    bias column
    o_ref: (C_out, tl)   already-transposed output tile -> (B, C, L) layout
    """
    # W @ X^T on the MXU (contract the C_in dim of both operands), f32 accumulate.
    acc = lax.dot_general(
        w_ref[...], x_ref[...],
        dimension_numbers=(((1,), (1,)), ((), ())),
        preferred_element_type=jnp.float32,
    )                                            # (C_out, tl)
    o_ref[...] = (acc + b_ref[...]).astype(o_ref.dtype)


def apply_conv(x, weight, bias, *, max_l_tile=512):
    """ApplyConv.forward with func = Linear(C, C):  (B, C, L) -> (B, C, L)."""
    B, C, L = x.shape
    C_out, C_in = weight.shape
    assert C_in == C and C_out == C, "func must map C -> C to satisfy the module's reshape"

    # Literal module semantics: row-major reshape of the ORIGINAL (B, C, L)
    # buffer into (B*L, C) rows; viewed as (B, L, C) so tiles stay per-batch.
    x3d = x.reshape(B, L, C_in)

    # L tile: full L when small, otherwise a large lane-dense tile (multiple of 128).
    tl = L if L <= max_l_tile else max_l_tile
    grid = (B, pl.cdiv(L, tl))

    b2d = bias.reshape(C_out, 1)

    itemsize = jnp.dtype(x.dtype).itemsize
    cost = pl.CostEstimate(
        flops=2 * B * L * C_in * C_out,
        transcendentals=0,
        bytes_accessed=(x.size + weight.size + bias.size + B * C_out * L) * itemsize,
    )

    return pl.pallas_call(
        _linear_t_kernel,
        out_shape=jax.ShapeDtypeStruct((B, C_out, L), x.dtype),
        grid_spec=pltpu.PrefetchScalarGridSpec(
            num_scalar_prefetch=0,
            grid=grid,
            in_specs=[
                # (tl, C_in) rows for batch b, L-tile li (leading batch dim squeezed)
                pl.BlockSpec((None, tl, C_in), lambda b, li: (b, li, 0)),
                # full weight, kept resident; contracted in-kernel (no host .T)
                pl.BlockSpec((C_out, C_in), lambda b, li: (0, 0)),
                pl.BlockSpec((C_out, 1), lambda b, li: (0, 0)),
            ],
            # transposed (C_out, tl) tile written directly into the (B, C, L) output
            out_specs=pl.BlockSpec((None, C_out, tl), lambda b, li: (b, 0, li)),
        ),
        compiler_params=pltpu.CompilerParams(
            # both axes independent -> both TensorCores used on v7x; free on v5e/v6e
            dimension_semantics=("parallel", "parallel"),
            vmem_limit_bytes=64 * 1024 * 1024,
        ),
        cost_estimate=cost,
    )(x3d, weight, b2d)


if __name__ == "__main__":
    # Small but lane-dense shapes: C = 128 (full lane width), L = 128 (one full tile).
    B, C, L = 2, 128, 128

    key = jax.random.PRNGKey(0)
    kx, kw, kb = jax.random.split(key, 3)
    x = jax.random.normal(kx, (B, C, L), dtype=jnp.float32)
    # Deterministic "func" parameters: Linear(C, C)
    weight = jax.random.normal(kw, (C, C), dtype=jnp.float32) * 0.1
    bias = jax.random.normal(kb, (C,), dtype=jnp.float32) * 0.1

    out = jax.block_until_ready(apply_conv(x, weight, bias))

    # Pure-JAX reference of the literal PyTorch forward.
    ref2d = x.reshape(-1, C) @ weight.T + bias
    ref = jnp.transpose(ref2d.reshape(B, L, C), (0, 2, 1))
    assert out.shape == (B, C, L)
    assert jnp.allclose(out, ref, atol=1e-4, rtol=1e-4), float(jnp.max(jnp.abs(out - ref)))

    print("KERNEL_OK")
</pallas_src>

<mosaic_0001>
module attributes {stable_mosaic.version = 11 : i64} {
  func.func @_linear_t_kernel(%arg0: i32, %arg1: i32, %arg2: memref<1x128x128xf32, #tpu.memory_space<vmem>>, %arg3: memref<128x128xf32, #tpu.memory_space<vmem>>, %arg4: memref<128x1xf32, #tpu.memory_space<vmem>>, %arg5: memref<1x128x128xf32, #tpu.memory_space<vmem>>) attributes {dimension_semantics = [#tpu.dimension_semantics<parallel>, #tpu.dimension_semantics<parallel>], iteration_bounds = array<i64: 2, 1>, scalar_prefetch = 0 : i64, scratch_operands = 0 : i64, tpu.core_type = #tpu.core_type<tc>, window_params = [{transform_indices = @transform_0, window_bounds = array<i64: 1, 128, 128>}, {pipeline_mode = #tpu.pipeline_mode<synchronous>, transform_indices = @transform_1, window_bounds = array<i64: 128, 128>}, {pipeline_mode = #tpu.pipeline_mode<synchronous>, transform_indices = @transform_2, window_bounds = array<i64: 128, 1>}, {transform_indices = @transform_3, window_bounds = array<i64: 1, 128, 128>}]} {
    %c0 = arith.constant 0 : index
    %c0_0 = arith.constant 0 : index
    %0 = vector.load %arg3[%c0, %c0_0] : memref<128x128xf32, #tpu.memory_space<vmem>>, vector<128x128xf32>
    %c0_1 = arith.constant 0 : index
    %c0_2 = arith.constant 0 : index
    %c0_3 = arith.constant 0 : index
    %1 = vector.load %arg2[%c0_1, %c0_2, %c0_3] : memref<1x128x128xf32, #tpu.memory_space<vmem>>, vector<1x128x128xf32>
    %2 = vector.shape_cast %1 : vector<1x128x128xf32> to vector<128x128xf32>
    %cst = arith.constant dense<0.000000e+00> : vector<128x128xf32>
    %3 = tpu.matmul %0, %2, %cst {dimension_numbers = #tpu.dot_dimension_numbers<[1], [1], [0], [0], [0, 0, 1, 0], [], []>} : vector<128x128xf32>, vector<128x128xf32>, vector<128x128xf32> -> vector<128x128xf32>
    %c0_4 = arith.constant 0 : index
    %c0_5 = arith.constant 0 : index
    %4 = vector.load %arg4[%c0_4, %c0_5] : memref<128x1xf32, #tpu.memory_space<vmem>>, vector<128x1xf32>
    %5 = vector.broadcast %4 : vector<128x1xf32> to vector<128x128xf32>
    %6 = arith.addf %3, %5 : vector<128x128xf32>
    %c0_6 = arith.constant 0 : index
    %c0_7 = arith.constant 0 : index
    %c0_8 = arith.constant 0 : index
    %7 = vector.load %arg5[%c0_6, %c0_7, %c0_8] : memref<1x128x128xf32, #tpu.memory_space<vmem>>, vector<1x128x128xf32>
    %8 = vector.shape_cast %7 : vector<1x128x128xf32> to vector<128x128xf32>
    %9 = vector.shape_cast %6 : vector<128x128xf32> to vector<1x128x128xf32>
    tpu.vector_store %arg5[%c0_6, %c0_7, %c0_8], %9 {strides = array<i32>} : memref<1x128x128xf32, #tpu.memory_space<vmem>>, vector<1x128x128xf32>,
    return
  }
  func.func @transform_0(%arg0: i32, %arg1: i32) -> (i32, i32, i32) {
    %c0_i32 = arith.constant 0 : i32
    %c0_i32_0 = arith.constant 0 : i32
    return %arg0, %arg1, %c0_i32 : i32, i32, i32
  }
  func.func @transform_1(%arg0: i32, %arg1: i32) -> (i32, i32) {
    %c0_i32 = arith.constant 0 : i32
    %c0_i32_0 = arith.constant 0 : i32
    %c0_i32_1 = arith.constant 0 : i32
    return %c0_i32, %c0_i32_0 : i32, i32
  }
  func.func @transform_2(%arg0: i32, %arg1: i32) -> (i32, i32) {
    %c0_i32 = arith.constant 0 : i32
    %c0_i32_0 = arith.constant 0 : i32
    %c0_i32_1 = arith.constant 0 : i32
    return %c0_i32, %c0_i32_0 : i32, i32
  }
  func.func @transform_3(%arg0: i32, %arg1: i32) -> (i32, i32, i32) {
    %c0_i32 = arith.constant 0 : i32
    %c0_i32_0 = arith.constant 0 : i32
    return %arg0, %c0_i32, %arg1 : i32, i32, i32
  }
}

</mosaic_0001>

<llo_original>
// kernel: tpu_custom_call.1
$region0: #{tpu_custom_call.1}
  #allocation0 [shape = 'u32[]', space=smem, size = 0x4, offset = 0x4, fixed_abs, tag = 'smem constant byte address 0x4 - core index']
  #allocation1 [shape = 'u32[144,128]{1,0:T(1,128)}', space=vmem, size = 0x12000, scoped, tag = 'internal scratch']
  %s0 = inlined_call_operand.hbm [shape: f32[2,128,128], index: 0, kind: input, shape index: {}]
  %s1 = inlined_call_operand.hbm [shape: f32[128,128], index: 1, kind: input, shape index: {}]
  %s2 = inlined_call_operand.hbm [shape: f32[128,1], index: 2, kind: input, shape index: {}]
  %s3 = inlined_call_operand.hbm [shape: f32[2,128,128], index: 3, kind: output, shape index: {}]
  %s4 = sld [smem:[#allocation0]]
  $region57: #{tpu_custom_call.1} parent=0
    _
  %s6 = ssub.s32 1, %s4
  %s7 = scalar_select 0, %s6, %s4
  $region1: #{tpu_custom_call.1} parent=0
    #allocation2 [shape = 'u8[131072]{0}', space=vmem, size = 0x20000, scoped, tag = 'input window, operand 0']
    #allocation3 [shape = 's32[2]{0}', space=sflag, size = 0x8, scoped, tag = 'scoped memory for tpu_custom_call.1']
    #allocation4 [shape = 's32[2]{0}', space=sflag, size = 0x8, scoped, tag = 'scoped memory for tpu_custom_call.1']
    #allocation5 [shape = 'u8[65536]{0}', space=vmem, size = 0x10000, scoped, tag = 'input window, operand 1, single buffered']
    #allocation6 [shape = 's32[1]{0}', space=sflag, size = 0x4, scoped, tag = 'scoped memory for tpu_custom_call.1']
    #allocation7 [shape = 'u8[65536]{0}', space=vmem, size = 0x10000, scoped, tag = 'input window, operand 2, single buffered']
    #allocation8 [shape = 'u8[131072]{0}', space=vmem, size = 0x20000, scoped, tag = 'output window, operand 0']
    %8 = vsyncpa [#allocation3], 0
    %s9 = scalar_lea.sflag [#allocation3], 1
    %10 = vsyncpa %s9, 0
    %11 = vsyncpa [#allocation6], 0
    %12 = vsyncpa [#allocation4], 0
    %s13 = scalar_lea.sflag [#allocation4], 1
    %14 = vsyncpa %s13, 0
    loop: start=0, step=1, limit=4
    $region2: #{tpu_custom_call.1} parent=1 // loop_pre_header
      _
    $region3: #{tpu_custom_call.1} parent=1 // loop_header
      %s16 = sphi 0, %s20
      %p17 = scmp.ge.s32.totalorder %s16, 4
      %s23 = sphi 0, %s35
      %s24 = sphi 0, %s31
      %s25 = sphi 0, %s23
      %s26 = sphi 0, %s24
      %s27 = sphi 0, %s25
      %s28 = sphi 0, %s26
      %s40 = sphi 0, %s42
      %s43 = sphi 0, %s40
      %s44 = sphi 0, %s43
      %s60 = sphi 0, %s44
      %s64 = sphi 0, %s64
      %s66 = sphi 0, %s64
      %s67 = sphi 0, %s66
      %s81 = sphi 0, %s67
      %s85 = sphi 0, %s85
      %s87 = sphi 0, %s85
      %s88 = sphi 0, %s87
      %s102 = sphi 0, %s88
      %s110 = sphi 0, %s112
      %s113 = sphi 0, %s110
      %s114 = sphi 0, %s113
      %s130 = sphi 0, %s114
    $region4: #{tpu_custom_call.1} parent=1 // loop_header_branch
      %19 = sbr.rel (%p17) target = $region8
    $region5: #{tpu_custom_call.1} parent=1 // loop_body
      %s21 = ssub.s32 %s16, 1
      %s22 = ssub.s32 %s16, 2
      %s29 = sadd.s32 1, %s24
      %p30 = scmp.ge.s32.totalorder %s29, 1
      %s31 = scalar_select %p30, 0, %s29
      %s32 = sadd.s32 1, %s23
      %s33 = scalar_select %p30, %s32, %s23
      %p34 = scmp.ge.s32.totalorder %s33, 2
      %s35 = scalar_select %p34, 0, %s33
      %s36 = ssub.s32 %s23, %s35
      %s37 = ssub.s32 %s24, %s31
      %s38 = sor.u32 %s36, %s37
      %p39 = scmp.eq.s32.totalorder %s38, 0
      %s41 = sadd.s32 %s40, 1
      %s42 = scalar_select %p39, %s40, %s41
      %p45 = pneg %p39
      %p46 = scmp.eq.s32.totalorder %s16, 1
      %p47 = por %p45, %p46
      %p48 = scmp.ne.s32.totalorder %s40, %s43
      %p49 = scmp.eq.s32.totalorder %s16, 0
      %p50 = por %p48, %p49
      %p51 = scmp.ne.s32.totalorder %s40, %s43
      %p52 = scmp.eq.s32.totalorder %s21, 1
      %p53 = por %p51, %p52
      %p54 = scmp.ne.s32.totalorder %s43, %s44
      %p55 = scmp.eq.s32.totalorder %s21, 0
      %p56 = por %p54, %p55
      %p57 = scmp.ne.s32.totalorder %s43, %s44
      %p58 = scmp.eq.s32.totalorder %s22, 1
      %p59 = por %p57, %p58
      %p61 = scmp.ne.s32.totalorder %s44, %s60
      %p62 = scmp.eq.s32.totalorder %s22, 0
      %p63 = por %p61, %p62
      %s65 = sadd.s32 %s64, 1
      %p68 = scmp.eq.s32.totalorder %s16, 1
      %p69 = scmp.ne.s32.totalorder %s64, %s66
      %p70 = scmp.eq.s32.totalorder %s16, 0
      %p71 = por %p69, %p70
      %p72 = scmp.ne.s32.totalorder %s64, %s66
      %p73 = scmp.eq.s32.totalorder %s21, 1
      %p74 = por %p72, %p73
      %p75 = scmp.ne.s32.totalorder %s66, %s67
      %p76 = scmp.eq.s32.totalorder %s21, 0
      %p77 = por %p75, %p76
      %p78 = scmp.ne.s32.totalorder %s66, %s67
      %p79 = scmp.eq.s32.totalorder %s22, 1
      %p80 = por %p78, %p79
      %p82 = scmp.ne.s32.totalorder %s67, %s81
      %p83 = scmp.eq.s32.totalorder %s22, 0
      %p84 = por %p82, %p83
      %s86 = sadd.s32 %s85, 1
      %p89 = scmp.eq.s32.totalorder %s16, 1
      %p90 = scmp.ne.s32.totalorder %s85, %s87
      %p91 = scmp.eq.s32.totalorder %s16, 0
      %p92 = por %p90, %p91
      %p93 = scmp.ne.s32.totalorder %s85, %s87
      %p94 = scmp.eq.s32.totalorder %s21, 1
      %p95 = por %p93, %p94
      %p96 = scmp.ne.s32.totalorder %s87, %s88
      %p97 = scmp.eq.s32.totalorder %s21, 0
      %p98 = por %p96, %p97
      %p99 = scmp.ne.s32.totalorder %s87, %s88
      %p100 = scmp.eq.s32.totalorder %s22, 1
      %p101 = por %p99, %p100
      %p103 = scmp.ne.s32.totalorder %s88, %s102
      %p104 = scmp.eq.s32.totalorder %s22, 0
      %p105 = por %p103, %p104
      %s106 = ssub.s32 %s23, %s35
      %s107 = ssub.s32 %s24, %s31
      %s108 = sor.u32 %s106, %s107
      %p109 = scmp.eq.s32.totalorder %s108, 0
      %s111 = sadd.s32 %s110, 1
      %s112 = scalar_select %p109, %s110, %s111
      %p115 = pneg %p109
      %p116 = scmp.eq.s32.totalorder %s16, 1
      %p117 = por %p115, %p116
      %p118 = scmp.ne.s32.totalorder %s110, %s113
      %p119 = scmp.eq.s32.totalorder %s16, 0
      %p120 = por %p118, %p119
      %p121 = scmp.ne.s32.totalorder %s110, %s113
      %p122 = scmp.eq.s32.totalorder %s21, 1
      %p123 = por %p121, %p122
      %p124 = scmp.ne.s32.totalorder %s113, %s114
      %p125 = scmp.eq.s32.totalorder %s21, 0
      %p126 = por %p124, %p125
      %p127 = scmp.ne.s32.totalorder %s113, %s114
      %p128 = scmp.eq.s32.totalorder %s22, 1
      %p129 = por %p127, %p128
      %p131 = scmp.ne.s32.totalorder %s114, %s130
      %p132 = scmp.eq.s32.totalorder %s22, 0
      %p133 = por %p131, %p132
      %p134 = scmp.le.s32.totalorder 1, %s16
      %p135 = scmp.lt.s32.totalorder %s16, 3
      %p136 = pnand %p134, %p135
      %p137 = pneg %p136
      // Predicated region
      $region9: #{tpu_custom_call.1} parent=5 // pred_check
        _
      $region10: #{tpu_custom_call.1} parent=5 // pred_check_branch
        %139 = sbr.rel (%p136) target = $region12
      $region11: #{tpu_custom_call.1} parent=5 // pred_region
        %s140 = ssub.s32 %s16, 1
        // Predicated region
        $region13: #{tpu_custom_call.1} parent=11 // pred_check
          %p141 = pneg %p77
        $region14: #{tpu_custom_call.1} parent=11 // pred_check_branch
          %143 = sbr.rel (%p141) target = $region16
        $region15: #{tpu_custom_call.1} parent=11 // pred_region
          %s145 = ssub.s32 2048, 2048
          %146 = vsyncadd [#allocation6], %s145
          %s147 = sshll.u32 [#allocation5], 4
          %s148 = int_to_ptr.vmem [resolvable:$true] %s147
          %153 = dma.hbm_to_vmem [thread:$0]  %s1, 2048, %s148, [#allocation6], 128, 128, 8
        $region16: #{tpu_custom_call.1} parent=11 // pred_fallthru
          _
        // Predicated region
        $region17: #{tpu_custom_call.1} parent=11 // pred_check
          %p154 = pneg %p98
        $region18: #{tpu_custom_call.1} parent=11 // pred_check_branch
          %156 = sbr.rel (%p154) target = $region20
        $region19: #{tpu_custom_call.1} parent=11 // pred_region
          %s158 = ssub.s32 2048, 2048
          %159 = vsyncadd [#allocation6], %s158
          %s160 = sshll.u32 [#allocation7], 4
          %s161 = int_to_ptr.vmem [resolvable:$true] %s160
          %166 = dma.hbm_to_vmem [thread:$0]  %s2, 2048, %s161, [#allocation6], 128, 128, 8
        $region20: #{tpu_custom_call.1} parent=11 // pred_fallthru
          _
      $region12: #{tpu_custom_call.1} parent=5 // pred_fallthru
        _
      %p167 = scmp.lt.s32.totalorder %s16, 2
      // Predicated region
      $region21: #{tpu_custom_call.1} parent=5 // pred_check
        %p168 = pneg %p167
      $region22: #{tpu_custom_call.1} parent=5 // pred_check_branch
        %170 = sbr.rel (%p168) target = $region24
      $region23: #{tpu_custom_call.1} parent=5 // pred_region
        // Predicated region
        $region25: #{tpu_custom_call.1} parent=23 // pred_check
          %p171 = pneg %p50
        $region26: #{tpu_custom_call.1} parent=23 // pred_check_branch
          %173 = sbr.rel (%p171) target = $region28
        $region27: #{tpu_custom_call.1} parent=23 // pred_region
          %s174 = sand.u32 %s40, 1
          %s175 = scalar_lea.sflag [#allocation3], %s174
          %s176 = sand.u32 %s40, 1
          %s177 = smul.addr %s176, 128
          %s178 = scalar_lea.vmem [#allocation2], %s177
          %s179 = smul.u32 16, %s24
          %s181 = ssub.s32 2048, 2048
          %182 = vsyncadd %s175, %s181
          %s183 = smul.addr %s23, 16
          %s184 = sadd.s32 %s179, %s183
          %s185 = smul.addr %s184, 128
          %s186 = scalar_lea.hbm %s0, %s185
          %s187 = sshll.u32 %s178, 4
          %s188 = int_to_ptr.vmem [resolvable:$true] %s187
          %193 = dma.hbm_to_vmem [thread:$0]  %s186, 2048, %s188, %s175, 128, 128, 8
        $region28: #{tpu_custom_call.1} parent=23 // pred_fallthru
          _
      $region24: #{tpu_custom_call.1} parent=5 // pred_fallthru
        _
      %p194 = scmp.le.s32.totalorder 1, %s16
      %p195 = scmp.lt.s32.totalorder %s16, 3
      %p196 = pnand %p194, %p195
      %p197 = pneg %p196
      // Predicated region
      $region29: #{tpu_custom_call.1} parent=5 // pred_check
        _
      $region30: #{tpu_custom_call.1} parent=5 // pred_check_branch
        %199 = sbr.rel (%p196) target = $region32
      $region31: #{tpu_custom_call.1} parent=5 // pred_region
        %s200 = ssub.s32 %s16, 1
        %s201 = sand.u32 %s43, 1
        %s202 = scalar_lea.sflag [#allocation3], %s201
        %s203 = sand.u32 %s43, 1
        %s204 = smul.addr %s203, 128
        %s205 = scalar_lea.vmem [#allocation2], %s204
        // Predicated region
        $region33: #{tpu_custom_call.1} parent=31 // pred_check
          %p206 = pneg %p56
        $region34: #{tpu_custom_call.1} parent=31 // pred_check_branch
          %208 = sbr.rel (%p206) target = $region36
        $region35: #{tpu_custom_call.1} parent=31 // pred_region
          %209 = dma.done %s202, 2048
        $region36: #{tpu_custom_call.1} parent=31 // pred_fallthru
          _
        // Predicated region
        $region37: #{tpu_custom_call.1} parent=31 // pred_check
          %p210 = pneg %p77
        $region38: #{tpu_custom_call.1} parent=31 // pred_check_branch
          %212 = sbr.rel (%p210) target = $region40
        $region39: #{tpu_custom_call.1} parent=31 // pred_region
          %213 = dma.done [#allocation6], 2048
        $region40: #{tpu_custom_call.1} parent=31 // pred_fallthru
          _
        // Predicated region
        $region41: #{tpu_custom_call.1} parent=31 // pred_check
          %p214 = pneg %p98
        $region42: #{tpu_custom_call.1} parent=31 // pred_check_branch
          %216 = sbr.rel (%p214) target = $region44
        $region43: #{tpu_custom_call.1} parent=31 // pred_region
          %217 = dma.done [#allocation6], 2048
        $region44: #{tpu_custom_call.1} parent=31 // pred_fallthru
          _
        %s218 = sand.u32 %s43, 1
        %s219 = scalar_lea.sflag [#allocation3], %s218
        %s220 = sand.u32 %s43, 1
        %s221 = smul.addr %s220, 128
        %s222 = scalar_lea.vmem [#allocation2], %s221
        %p223 = pneg %p56
        %p224 = pneg %p53
        %p225 = pneg %p77
        %p226 = pneg %p74
        %p227 = pneg %p98
        %p228 = pneg %p95
        %p229 = pneg %p126
        %p230 = pneg %p123
        %s231 = sand.u32 %s113, 1
        %s232 = scalar_lea.sflag [#allocation4], %s231
        %s233 = sand.u32 %s113, 1
        %s234 = smul.addr %s233, 128
        %s235 = scalar_lea.vmem [#allocation8], %s234
        %s236 = smul.u32 16, %s26
        %v237 = vld [vmem:[#allocation5] sm:$0xff]
        %v238 = vld [vmem:[#allocation5 + $0x8] sm:$0xff]
        %v239 = vld [vmem:[#allocation5 + $0x10] sm:$0xff]
        %v240 = vld [vmem:[#allocation5 + $0x18] sm:$0xff]
        %v241 = vld [vmem:[#allocation5 + $0x20] sm:$0xff]
        %v242 = vld [vmem:[#allocation5 + $0x28] sm:$0xff]
        %v243 = vld [vmem:[#allocation5 + $0x30] sm:$0xff]
        %v244 = vld [vmem:[#allocation5 + $0x38] sm:$0xff]
        %v245 = vld [vmem:[#allocation5 + $0x40] sm:$0xff]
        %v246 = vld [vmem:[#allocation5 + $0x48] sm:$0xff]
        %v247 = vld [vmem:[#allocation5 + $0x50] sm:$0xff]
        %v248 = vld [vmem:[#allocation5 + $0x58] sm:$0xff]
        %v249 = vld [vmem:[#allocation5 + $0x60] sm:$0xff]
        %v250 = vld [vmem:[#allocation5 + $0x68] sm:$0xff]
        %v251 = vld [vmem:[#allocation5 + $0x70] sm:$0xff]
        %v252 = vld [vmem:[#allocation5 + $0x78] sm:$0xff]
        %v253 = vld [vmem:[%s205] sm:$0xff]
        %v254 = vld [vmem:[%s205 + $0x8] sm:$0xff]
        %v255 = vld [vmem:[%s205 + $0x10] sm:$0xff]
        %v256 = vld [vmem:[%s205 + $0x18] sm:$0xff]
        %v257 = vld [vmem:[%s205 + $0x20] sm:$0xff]
        %v258 = vld [vmem:[%s205 + $0x28] sm:$0xff]
        %v259 = vld [vmem:[%s205 + $0x30] sm:$0xff]
        %v260 = vld [vmem:[%s205 + $0x38] sm:$0xff]
        %v261 = vld [vmem:[%s205 + $0x40] sm:$0xff]
        %v262 = vld [vmem:[%s205 + $0x48] sm:$0xff]
        %v263 = vld [vmem:[%s205 + $0x50] sm:$0xff]
        %v264 = vld [vmem:[%s205 + $0x58] sm:$0xff]
        %v265 = vld [vmem:[%s205 + $0x60] sm:$0xff]
        %v266 = vld [vmem:[%s205 + $0x68] sm:$0xff]
        %v267 = vld [vmem:[%s205 + $0x70] sm:$0xff]
        %v268 = vld [vmem:[%s205 + $0x78] sm:$0xff]
        %v269 = vld [vmem:[#allocation7] sm:$0xff]
        %v270 = vld [vmem:[#allocation7 + $0x8] sm:$0xff]
        %v271 = vld [vmem:[#allocation7 + $0x10] sm:$0xff]
        %v272 = vld [vmem:[#allocation7 + $0x18] sm:$0xff]
        %v273 = vld [vmem:[#allocation7 + $0x20] sm:$0xff]
        %v274 = vld [vmem:[#allocation7 + $0x28] sm:$0xff]
        %v275 = vld [vmem:[#allocation7 + $0x30] sm:$0xff]
        %v276 = vld [vmem:[#allocation7 + $0x38] sm:$0xff]
        %v277 = vld [vmem:[#allocation7 + $0x40] sm:$0xff]
        %v278 = vld [vmem:[#allocation7 + $0x48] sm:$0xff]
        %v279 = vld [vmem:[#allocation7 + $0x50] sm:$0xff]
        %v280 = vld [vmem:[#allocation7 + $0x58] sm:$0xff]
        %v281 = vld [vmem:[#allocation7 + $0x60] sm:$0xff]
        %v282 = vld [vmem:[#allocation7 + $0x68] sm:$0xff]
        %v283 = vld [vmem:[#allocation7 + $0x70] sm:$0xff]
        %v284 = vld [vmem:[#allocation7 + $0x78] sm:$0xff]
        %286 = vset.pattern.permute.xlu0 0
        %287 = vperm.xlu0 %286, %v269
        %v288 = vpop.permute.xlu0 %287
        %291 = vset.pattern.permute.xlu0 0
        %292 = vperm.xlu0 %291, %v270
        %v293 = vpop.permute.xlu0 %292
        %296 = vset.pattern.permute.xlu0 0
        %297 = vperm.xlu0 %296, %v271
        %v298 = vpop.permute.xlu0 %297
        %301 = vset.pattern.permute.xlu0 0
        %302 = vperm.xlu0 %301, %v272
        %v303 = vpop.permute.xlu0 %302
        %306 = vset.pattern.permute.xlu0 0
        %307 = vperm.xlu0 %306, %v273
        %v308 = vpop.permute.xlu0 %307
        %311 = vset.pattern.permute.xlu0 0
        %312 = vperm.xlu0 %311, %v274
        %v313 = vpop.permute.xlu0 %312
        %316 = vset.pattern.permute.xlu0 0
        %317 = vperm.xlu0 %316, %v275
        %v318 = vpop.permute.xlu0 %317
        %321 = vset.pattern.permute.xlu0 0
        %322 = vperm.xlu0 %321, %v276
        %v323 = vpop.permute.xlu0 %322
        %326 = vset.pattern.permute.xlu0 0
        %327 = vperm.xlu0 %326, %v277
        %v328 = vpop.permute.xlu0 %327
        %331 = vset.pattern.permute.xlu0 0
        %332 = vperm.xlu0 %331, %v278
        %v333 = vpop.permute.xlu0 %332
        %336 = vset.pattern.permute.xlu0 0
        %337 = vperm.xlu0 %336, %v279
        %v338 = vpop.permute.xlu0 %337
        %341 = vset.pattern.permute.xlu0 0
        %342 = vperm.xlu0 %341, %v280
        %v343 = vpop.permute.xlu0 %342
        %346 = vset.pattern.permute.xlu0 0
        %347 = vperm.xlu0 %346, %v281
        %v348 = vpop.permute.xlu0 %347
        %351 = vset.pattern.permute.xlu0 0
        %352 = vperm.xlu0 %351, %v282
        %v353 = vpop.permute.xlu0 %352
        %356 = vset.pattern.permute.xlu0 0
        %357 = vperm.xlu0 %356, %v283
        %v358 = vpop.permute.xlu0 %357
        %361 = vset.pattern.permute.xlu0 0
        %362 = vperm.xlu0 %361, %v284
        %v363 = vpop.permute.xlu0 %362
        %365 = vmatprep.subr.mxu0 0.0
        %366 = vmatpush1.xpose.msra.mxu0 %v253
        %367 = vmatprep.subr.mxu0 0.0
        %368 = vmatpush1.xpose.msra.mxu0 %v254
        %369 = vmatprep.subr.mxu0 0.0
        %370 = vmatpush1.xpose.msra.mxu0 %v255
        %371 = vmatprep.subr.mxu0 0.0
        %372 = vmatpush1.xpose.msra.mxu0 %v256
        %373 = vmatprep.subr.mxu0 0.0
        %374 = vmatpush1.xpose.msra.mxu0 %v257
        %375 = vmatprep.subr.mxu0 0.0
        %376 = vmatpush1.xpose.msra.mxu0 %v258
        %377 = vmatprep.subr.mxu0 0.0
        %378 = vmatpush1.xpose.msra.mxu0 %v259
        %379 = vmatprep.subr.mxu0 0.0
        %380 = vmatpush1.xpose.msra.mxu0 %v260
        %381 = vmatprep.subr.mxu0 0.0
        %382 = vmatpush1.xpose.msra.mxu0 %v261
        %383 = vmatprep.subr.mxu0 0.0
        %384 = vmatpush1.xpose.msra.mxu0 %v262
        %385 = vmatprep.subr.mxu0 0.0
        %386 = vmatpush1.xpose.msra.mxu0 %v263
        %387 = vmatprep.subr.mxu0 0.0
        %388 = vmatpush1.xpose.msra.mxu0 %v264
        %389 = vmatprep.subr.mxu0 0.0
        %390 = vmatpush1.xpose.msra.mxu0 %v265
        %391 = vmatprep.subr.mxu0 0.0
        %392 = vmatpush1.xpose.msra.mxu0 %v266
        %393 = vmatprep.subr.mxu0 0.0
        %394 = vmatpush1.xpose.msra.mxu0 %v267
        %395 = vmatprep.subr.mxu0 0.0
        %396 = vmatpush1.xpose.msra.mxu0 %v268
        %397 = vmatprep.subr.mxu0 0.0
        %398 = vmatpush1.xpose.msra.mxu0 0.0
        %399 = vmatprep.subr.mxu0 0.0
        %400 = vmatpush1.xpose.msra.mxu0 0.0
        %401 = vmatprep.subr.mxu0 0.0
        %402 = vmatpush1.xpose.msra.mxu0 0.0
        %403 = vmatprep.subr.mxu0 0.0
        %404 = vmatpush1.xpose.msra.mxu0 0.0
        %405 = vmatprep.subr.mxu0 0.0
        %406 = vmatpush1.xpose.msra.mxu0 0.0
        %407 = vmatprep.subr.mxu0 0.0
        %408 = vmatpush1.xpose.msra.mxu0 0.0
        %409 = vmatprep.subr.mxu0 0.0
        %410 = vmatpush1.xpose.msra.mxu0 0.0
        %411 = vmatprep.subr.mxu0 0.0
        %412 = vmatpush1.xpose.msra.mxu0 0.0
        %413 = vmatprep.subr.mxu0 0.0
        %414 = vmatpush1.xpose.msra.mxu0 0.0
        %415 = vmatprep.subr.mxu0 0.0
        %416 = vmatpush1.xpose.msra.mxu0 0.0
        %417 = vmatprep.subr.mxu0 0.0
        %418 = vmatpush1.xpose.msra.mxu0 0.0
        %419 = vmatprep.subr.mxu0 0.0
        %420 = vmatpush1.xpose.msra.mxu0 0.0
        %421 = vmatprep.subr.mxu0 0.0
        %422 = vmatpush1.xpose.msra.mxu0 0.0
        %423 = vmatprep.subr.mxu0 0.0
        %424 = vmatpush1.xpose.msra.mxu0 0.0
        %425 = vmatprep.subr.mxu0 0.0
        %426 = vmatpush1.xpose.msra.mxu0 0.0
        %427 = vmatprep.subr.mxu0 0.0
        %428 = vmatpush1.xpose.msra.mxu0 0.0
        %429 = vmatprep.mubr.f32.mxu0 0.0
        %430 = vmatmul.mubr.f32.gmra.mrb[0].mxu0 %v237
        %v431 = vpop.f32.mrb[0].mxu0
        %v432 = vadd.f32 %v288, %v431
        %v433 = vpop.f32.mrb[0].mxu0
        %434 = vmatprep.mubr.f32.mxu0 0.0
        %435 = vmatmul.mubr.f32.gmra.mrb[0].mxu0 %v238
        %v436 = vpop.f32.mrb[0].mxu0
        %v437 = vadd.f32 %v293, %v436
        %v438 = vpop.f32.mrb[0].mxu0
        %439 = vmatprep.mubr.f32.mxu0 0.0
        %440 = vmatmul.mubr.f32.gmra.mrb[0].mxu0 %v239
        %v441 = vpop.f32.mrb[0].mxu0
        %v442 = vadd.f32 %v298, %v441
        %v443 = vpop.f32.mrb[0].mxu0
        %444 = vmatprep.mubr.f32.mxu0 0.0
        %445 = vmatmul.mubr.f32.gmra.mrb[0].mxu0 %v240
        %v446 = vpop.f32.mrb[0].mxu0
        %v447 = vadd.f32 %v303, %v446
        %v448 = vpop.f32.mrb[0].mxu0
        %449 = vmatprep.mubr.f32.mxu0 0.0
        %450 = vmatmul.mubr.f32.gmra.mrb[0].mxu0 %v241
        %v451 = vpop.f32.mrb[0].mxu0
        %v452 = vadd.f32 %v308, %v451
        %v453 = vpop.f32.mrb[0].mxu0
        %454 = vmatprep.mubr.f32.mxu0 0.0
        %455 = vmatmul.mubr.f32.gmra.mrb[0].mxu0 %v242
        %v456 = vpop.f32.mrb[0].mxu0
        %v457 = vadd.f32 %v313, %v456
        %v458 = vpop.f32.mrb[0].mxu0
        %459 = vmatprep.mubr.f32.mxu0 0.0
        %460 = vmatmul.mubr.f32.gmra.mrb[0].mxu0 %v243
        %v461 = vpop.f32.mrb[0].mxu0
        %v462 = vadd.f32 %v318, %v461
        %v463 = vpop.f32.mrb[0].mxu0
        %464 = vmatprep.mubr.f32.mxu0 0.0
        %465 = vmatmul.mubr.f32.gmra.mrb[0].mxu0 %v244
        %v466 = vpop.f32.mrb[0].mxu0
        %v467 = vadd.f32 %v323, %v466
        %v468 = vpop.f32.mrb[0].mxu0
        %469 = vmatprep.mubr.f32.mxu0 0.0
        %470 = vmatmul.mubr.f32.gmra.mrb[0].mxu0 %v245
        %v471 = vpop.f32.mrb[0].mxu0
        %v472 = vadd.f32 %v328, %v471
        %v473 = vpop.f32.mrb[0].mxu0
        %474 = vmatprep.mubr.f32.mxu0 0.0
        %475 = vmatmul.mubr.f32.gmra.mrb[0].mxu0 %v246
        %v476 = vpop.f32.mrb[0].mxu0
        %v477 = vadd.f32 %v333, %v476
        %v478 = vpop.f32.mrb[0].mxu0
        %479 = vmatprep.mubr.f32.mxu0 0.0
        %480 = vmatmul.mubr.f32.gmra.mrb[0].mxu0 %v247
        %v481 = vpop.f32.mrb[0].mxu0
        %v482 = vadd.f32 %v338, %v481
        %v483 = vpop.f32.mrb[0].mxu0
        %484 = vmatprep.mubr.f32.mxu0 0.0
        %485 = vmatmul.mubr.f32.gmra.mrb[0].mxu0 %v248
        %v486 = vpop.f32.mrb[0].mxu0
        %v487 = vadd.f32 %v343, %v486
        %v488 = vpop.f32.mrb[0].mxu0
        %489 = vmatprep.mubr.f32.mxu0 0.0
        %490 = vmatmul.mubr.f32.gmra.mrb[0].mxu0 %v249
        %v491 = vpop.f32.mrb[0].mxu0
        %v492 = vadd.f32 %v348, %v491
        %v493 = vpop.f32.mrb[0].mxu0
        %494 = vmatprep.mubr.f32.mxu0 0.0
        %495 = vmatmul.mubr.f32.gmra.mrb[0].mxu0 %v250
        %v496 = vpop.f32.mrb[0].mxu0
        %v497 = vadd.f32 %v353, %v496
        %v498 = vpop.f32.mrb[0].mxu0
        %499 = vmatprep.mubr.f32.mxu0 0.0
        %500 = vmatmul.mubr.f32.gmra.mrb[0].mxu0 %v251
        %v501 = vpop.f32.mrb[0].mxu0
        %v502 = vadd.f32 %v358, %v501
        %v503 = vpop.f32.mrb[0].mxu0
        %504 = vmatprep.mubr.f32.mxu0 0.0
        %505 = vmatmul.mubr.f32.gmra.mrb[0].mxu0 %v252
        %v506 = vpop.f32.mrb[0].mxu0
        %v507 = vadd.f32 %v363, %v506
        %v508 = vpop.f32.mrb[0].mxu0
        %509 = vdwg.mxu0
        %510 = vst [vmem:[%s235] sm:$0xff] %v432
        %511 = vst [vmem:[%s235 + $0x8] sm:$0xff] %v437
        %512 = vst [vmem:[%s235 + $0x10] sm:$0xff] %v442
        %513 = vst [vmem:[%s235 + $0x18] sm:$0xff] %v447
        %514 = vst [vmem:[%s235 + $0x20] sm:$0xff] %v452
        %515 = vst [vmem:[%s235 + $0x28] sm:$0xff] %v457
        %516 = vst [vmem:[%s235 + $0x30] sm:$0xff] %v462
        %517 = vst [vmem:[%s235 + $0x38] sm:$0xff] %v467
        %518 = vst [vmem:[%s235 + $0x40] sm:$0xff] %v472
        %519 = vst [vmem:[%s235 + $0x48] sm:$0xff] %v477
        %520 = vst [vmem:[%s235 + $0x50] sm:$0xff] %v482
        %521 = vst [vmem:[%s235 + $0x58] sm:$0xff] %v487
        %522 = vst [vmem:[%s235 + $0x60] sm:$0xff] %v492
        %523 = vst [vmem:[%s235 + $0x68] sm:$0xff] %v497
        %524 = vst [vmem:[%s235 + $0x70] sm:$0xff] %v502
        %525 = vst [vmem:[%s235 + $0x78] sm:$0xff] %v507
        %s526 = sand.u32 %s113, 1
        %s527 = scalar_lea.sflag [#allocation4], %s526
        %s528 = sand.u32 %s113, 1
        %s529 = smul.addr %s528, 128
        %s530 = scalar_lea.vmem [#allocation8], %s529
        // Predicated region
        $region45: #{tpu_custom_call.1} parent=31 // pred_check
          %p531 = pneg %p123
        $region46: #{tpu_custom_call.1} parent=31 // pred_check_branch
          %533 = sbr.rel (%p531) target = $region48
        $region47: #{tpu_custom_call.1} parent=31 // pred_region
          %s535 = ssub.s32 2048, 2048
          %536 = vsyncadd %s527, %s535
          %s537 = smul.addr %s25, 16
          %s538 = sadd.s32 %s26, %s537
          %s539 = smul.addr %s538, 128
          %s540 = scalar_lea.hbm %s3, %s539
          %s541 = sshll.u32 %s530, 4
          %s542 = int_to_ptr.vmem [resolvable:$true] %s541
          %547 = dma.vmem_to_hbm [thread:$0]  %s542, 2048, %s540, %s527, 128, 128, 8
        $region48: #{tpu_custom_call.1} parent=31 // pred_fallthru
          _
      $region32: #{tpu_custom_call.1} parent=5 // pred_fallthru
        _
      %p548 = scmp.le.s32.totalorder 2, %s16
      // Predicated region
      $region49: #{tpu_custom_call.1} parent=5 // pred_check
        %p549 = pneg %p548
      $region50: #{tpu_custom_call.1} parent=5 // pred_check_branch
        %551 = sbr.rel (%p549) target = $region52
      $region51: #{tpu_custom_call.1} parent=5 // pred_region
        %s552 = ssub.s32 %s16, 2
        // Predicated region
        $region53: #{tpu_custom_call.1} parent=51 // pred_check
          %p553 = pneg %p129
        $region54: #{tpu_custom_call.1} parent=51 // pred_check_branch
          %555 = sbr.rel (%p553) target = $region56
        $region55: #{tpu_custom_call.1} parent=51 // pred_region
          %s556 = sand.u32 %s114, 1
          %s557 = scalar_lea.sflag [#allocation4], %s556
          %s558 = sand.u32 %s114, 1
          %s559 = smul.addr %s558, 128
          %s560 = scalar_lea.vmem [#allocation8], %s559
          %561 = dma.done %s557, 2048
        $region56: #{tpu_custom_call.1} parent=51 // pred_fallthru
          _
      $region52: #{tpu_custom_call.1} parent=5 // pred_fallthru
        _
    $region6: #{tpu_custom_call.1} parent=1 // loop_footer
      %s20 = sadd.s32 1, %s16
    $region7: #{tpu_custom_call.1} parent=1 // loop_footer_branch
      %15 = sbr.rel target = $region3
    $region8: #{tpu_custom_call.1} parent=1 // loop_exit
      _
    %562 = vsyncpa [#allocation3], 1
    %s563 = scalar_lea.sflag [#allocation3], 1
    %564 = vsyncpa %s563, 1
    %565 = vsyncpa [#allocation6], 1
    %566 = vsyncpa [#allocation4], 1
    %s567 = scalar_lea.sflag [#allocation4], 1
    %568 = vsyncpa %s567, 1

</llo_original>
